<compile_context>
chip_gen: v6e
topology: v6e:2x2x1
jax: 0.10.0
libtpu: 0.0.40
codegen_flags: <defaults>
</compile_context>

<pallas_src>
import functools

import jax
import jax.numpy as jnp
from jax.experimental import pallas as pl
from jax.experimental.pallas import tpu as pltpu


def _round_up(x, m):
    return ((x + m - 1) // m) * m


def _cdiv(a, b):
    return (a + b - 1) // b


# ---------------------------------------------------------------------------
# Kernel body
# ---------------------------------------------------------------------------
def _perception_kernel(x_ref, w1_ref, b1_ref, w2_ref, b2_ref, o_ref):
    # Layer 1: bf16 operands on the MXU, f32 accumulation; bias-add + sigmoid
    # epilogue in f32.  The approximate (EUP) reciprocal is fine here because
    # h is immediately cast to bf16 for the second matmul, which rounds away
    # the ~1e-3 relative error.
    h = jnp.dot(x_ref[...], w1_ref[...], preferred_element_type=jnp.float32)
    h = pl.reciprocal(1.0 + jnp.exp(-(h + b1_ref[...])), approx=True)

    # Layer 2: bf16 operands on the MXU, f32 accumulation; EXACT sigmoid for
    # the final f32-visible output.
    y = jnp.dot(h.astype(w2_ref.dtype), w2_ref[...],
                preferred_element_type=jnp.float32)
    y = 1.0 / (1.0 + jnp.exp(-(y + b2_ref[...])))
    o_ref[...] = y.astype(o_ref.dtype)


# ---------------------------------------------------------------------------
# Generation-aware configuration
# ---------------------------------------------------------------------------
@functools.lru_cache(maxsize=1)
def _tpu_config():
    """Returns (tile_budget_bytes, vmem_limit_bytes, num_tensorcores)."""
    vmem_cap = 64 * 1024 * 1024  # conservative default (v7x per-TC VMEM)
    try:
        info = pltpu.get_tpu_info()
        vmem_cap = int(getattr(info, "vmem_capacity_bytes", vmem_cap))
    except Exception:
        pass

    cores = 1
    try:
        kind = jax.devices()[0].device_kind.lower()
        # v7x (and v4/v5p megacore) expose 2 TensorCores behind one device;
        # "parallel" grid axes shard across them.
        if any(tag in kind for tag in ("v7", "7x", "v4", "v5p")):
            cores = 2
    except Exception:
        pass

    # v5e/v6e (128 MiB VMEM) -> 96 MiB limit; v7x (64 MiB) -> 48 MiB limit.
    vmem_limit = min(vmem_cap * 3 // 4, 100 * 1024 * 1024)
    tile_budget = vmem_limit // 2  # headroom for pipeline double-buffering
    return tile_budget, vmem_limit, cores


def _pick_block_b(b16, in_dim, hid_pad, out_dim, budget_bytes, num_cores):
    """Batch tile (multiple of 16) sized against the VMEM budget + core count."""
    # Resident weights/biases; assume the pipeline still double-buffers
    # constant-index blocks (x2 is conservative). bf16 weights, f32 biases.
    fixed = 2 * (2 * (in_dim * hid_pad + hid_pad * out_dim)
                 + 4 * (hid_pad + out_dim))
    if fixed >= budget_bytes:
        raise ValueError(
            f"Perception weights need ~{fixed} bytes of VMEM (incl. "
            f"double-buffering) which exceeds the budget of {budget_bytes} "
            f"bytes; add a hid-dim reduction grid axis for dims this large.")
    # Per batch row: double-buffered bf16 x tile, double-buffered f32 out
    # tile, f32 + bf16 hidden intermediates.
    per_row = 2 * 2 * in_dim + 2 * 4 * out_dim + (4 + 2) * hid_pad
    tb_fit = max(16, ((budget_bytes - fixed) // per_row) // 16 * 16)

    # Single-TC chips: 1 grid step if it fits (each step costs ~0.35us).
    # Dual-TC chips: >=2 steps so the "parallel" axis actually shards.
    target_steps = num_cores if b16 >= 16 * num_cores else 1
    tb_want = _round_up(_cdiv(b16, target_steps), 16)
    return min(tb_want, tb_fit, b16)


# ---------------------------------------------------------------------------
# Parameter preparation (one-time; hoisted out of the forward path)
# ---------------------------------------------------------------------------
def prepare_perception_params(w1, b1, w2, b2):
    """Pad hid_dim to the 128-lane quantum and cast weights to bf16, ONCE.

    Zero-padding is exact: padded hidden lanes produce sigmoid(0)=0.5, which
    then multiplies all-zero padded rows of w2 and contributes nothing.
    """
    in_dim, hid_dim = w1.shape
    out_dim = w2.shape[1]
    hid_pad = _round_up(hid_dim, 128)

    w1_p = jnp.zeros((in_dim, hid_pad), jnp.bfloat16).at[:, :hid_dim].set(
        w1.astype(jnp.bfloat16))
    b1_p = jnp.zeros((1, hid_pad), jnp.float32).at[:, :hid_dim].set(
        b1.reshape(1, hid_dim).astype(jnp.float32))
    w2_p = jnp.zeros((hid_pad, out_dim), jnp.bfloat16).at[:hid_dim, :].set(
        w2.astype(jnp.bfloat16))
    b2_p = b2.reshape(1, out_dim).astype(jnp.float32)
    return w1_p, b1_p, w2_p, b2_p


# ---------------------------------------------------------------------------
# Forward pass
# ---------------------------------------------------------------------------
@functools.partial(jax.jit, static_argnames=("block_b", "vmem_limit_bytes"))
def _perception_forward_impl(x, w1_p, b1_p, w2_p, b2_p, *, block_b,
                             vmem_limit_bytes):
    B, in_dim = x.shape
    hid_pad = w1_p.shape[1]
    out_dim = w2_p.shape[1]
    out_dtype = x.dtype

    # Pad the batch only to a multiple of the tile (tile itself is <= the
    # 16-row-padded batch, so waste is bounded by <1 row group).
    b_pad = _cdiv(B, block_b) * block_b
    x_c = x.astype(jnp.bfloat16)
    if b_pad != B:
        x_c = jnp.zeros((b_pad, in_dim), jnp.bfloat16).at[:B].set(x_c)

    grid = (b_pad // block_b,)
    y = pl.pallas_call(
        _perception_kernel,
        out_shape=jax.ShapeDtypeStruct((b_pad, out_dim), out_dtype),
        grid=grid,
        in_specs=[
            pl.BlockSpec((block_b, in_dim), lambda i: (i, 0)),   # streamed batch
            pl.BlockSpec((in_dim, hid_pad), lambda i: (0, 0)),   # resident weights
            pl.BlockSpec((1, hid_pad), lambda i: (0, 0)),
            pl.BlockSpec((hid_pad, out_dim), lambda i: (0, 0)),
            pl.BlockSpec((1, out_dim), lambda i: (0, 0)),
        ],
        # True-width output (out_dim == full array dim): narrow masked stores
        # beat an 8x-amplified padded slab + post-slice at these sizes.
        out_specs=pl.BlockSpec((block_b, out_dim), lambda i: (i, 0)),
        compiler_params=pltpu.CompilerParams(
            dimension_semantics=("parallel",),
            vmem_limit_bytes=vmem_limit_bytes,
        ),
    )(x_c, w1_p, b1_p, w2_p, b2_p)

    return y if b_pad == B else y[:B]


def perception_forward(x, w1_p, b1_p, w2_p, b2_p):
    """Two-layer sigmoid MLP forward. Takes PRE-PREPARED (padded bf16) params."""
    B, in_dim = x.shape
    hid_pad = w1_p.shape[1]
    out_dim = w2_p.shape[1]
    budget, vmem_limit, cores = _tpu_config()
    b16 = _round_up(max(B, 1), 16)
    tb = _pick_block_b(b16, in_dim, hid_pad, out_dim, budget, cores)
    return _perception_forward_impl(x, w1_p, b1_p, w2_p, b2_p,
                                    block_b=tb, vmem_limit_bytes=vmem_limit)


# ---------------------------------------------------------------------------
# Init matching PyTorch nn.Linear default (U[-1/sqrt(fan_in), +1/sqrt(fan_in)])
# ---------------------------------------------------------------------------
def init_perception_params(key, in_dim, hid_dim, out_dim, dtype=jnp.float32):
    k1, k2, k3, k4 = jax.random.split(key, 4)
    bound1 = 1.0 / jnp.sqrt(in_dim)
    bound2 = 1.0 / jnp.sqrt(hid_dim)
    w1 = jax.random.uniform(k1, (in_dim, hid_dim), dtype, -bound1, bound1)
    b1 = jax.random.uniform(k2, (1, hid_dim), dtype, -bound1, bound1)
    w2 = jax.random.uniform(k3, (hid_dim, out_dim), dtype, -bound2, bound2)
    b2 = jax.random.uniform(k4, (1, out_dim), dtype, -bound2, bound2)
    return w1, b1, w2, b2


if __name__ == "__main__":
    in_dim, hid_dim, out_dim = 32, 64, 16
    batch = 64

    key = jax.random.PRNGKey(0)
    kx, kp = jax.random.split(key)
    x = jax.random.normal(kx, (batch, in_dim), jnp.float32)
    w1, b1, w2, b2 = init_perception_params(kp, in_dim, hid_dim, out_dim)

    # One-time parameter preparation (hoisted out of the per-call path).
    params = prepare_perception_params(w1, b1, w2, b2)

    y = perception_forward(x, *params)
    jax.block_until_ready(y)
    assert y.shape == (batch, out_dim), y.shape
    assert y.dtype == x.dtype, y.dtype

    # Reference 1: same bf16-operand policy as the kernel (tight tolerance;
    # residual difference is the layer-1 approximate-reciprocal sigmoid,
    # which is below bf16 resolution).
    xc, w1c, w2c = (a.astype(jnp.bfloat16) for a in (x, w1, w2))
    h_ref = jax.nn.sigmoid(
        jnp.dot(xc, w1c, preferred_element_type=jnp.float32) + b1)
    y_bf16_ref = jax.nn.sigmoid(
        jnp.dot(h_ref.astype(jnp.bfloat16), w2c,
                preferred_element_type=jnp.float32) + b2)
    assert jnp.allclose(y, y_bf16_ref, atol=2e-2, rtol=0), (
        float(jnp.max(jnp.abs(y - y_bf16_ref))))

    # Reference 2: full-f32 PyTorch-equivalent forward (loose tolerance covers
    # the bf16 matmul operands).
    y_f32_ref = jax.nn.sigmoid(jax.nn.sigmoid(x @ w1 + b1) @ w2 + b2)
    assert jnp.allclose(y, y_f32_ref, atol=3e-2, rtol=0), (
        float(jnp.max(jnp.abs(y - y_f32_ref))))

    print("KERNEL_OK")
</pallas_src>

<mosaic_0001>
module attributes {stable_mosaic.version = 11 : i64} {
  func.func @_perception_kernel(%arg0: i32, %arg1: memref<64x32xbf16, #tpu.memory_space<vmem>>, %arg2: memref<32x128xbf16, #tpu.memory_space<vmem>>, %arg3: memref<1x128xf32, #tpu.memory_space<vmem>>, %arg4: memref<128x16xbf16, #tpu.memory_space<vmem>>, %arg5: memref<1x16xf32, #tpu.memory_space<vmem>>, %arg6: memref<64x16xf32, #tpu.memory_space<vmem>>) attributes {dimension_semantics = [#tpu.dimension_semantics<parallel>], iteration_bounds = array<i64: 1>, scalar_prefetch = 0 : i64, scratch_operands = 0 : i64, tpu.core_type = #tpu.core_type<tc>, window_params = [{transform_indices = @transform_0, window_bounds = array<i64: 64, 32>}, {pipeline_mode = #tpu.pipeline_mode<synchronous>, transform_indices = @transform_1, window_bounds = array<i64: 32, 128>}, {pipeline_mode = #tpu.pipeline_mode<synchronous>, transform_indices = @transform_2, window_bounds = array<i64: 1, 128>}, {pipeline_mode = #tpu.pipeline_mode<synchronous>, transform_indices = @transform_3, window_bounds = array<i64: 128, 16>}, {pipeline_mode = #tpu.pipeline_mode<synchronous>, transform_indices = @transform_4, window_bounds = array<i64: 1, 16>}, {transform_indices = @transform_5, window_bounds = array<i64: 64, 16>}]} {
    %c0 = arith.constant 0 : index
    %c0_0 = arith.constant 0 : index
    %0 = vector.load %arg1[%c0, %c0_0] : memref<64x32xbf16, #tpu.memory_space<vmem>>, vector<64x32xbf16>
    %c0_1 = arith.constant 0 : index
    %c0_2 = arith.constant 0 : index
    %1 = vector.load %arg2[%c0_1, %c0_2] : memref<32x128xbf16, #tpu.memory_space<vmem>>, vector<32x128xbf16>
    %cst = arith.constant dense<0.000000e+00> : vector<64x128xf32>
    %2 = tpu.matmul %0, %1, %cst {dimension_numbers = #tpu.dot_dimension_numbers<[1], [0], [0], [1], [0, 0, 1, 1], [], []>} : vector<64x32xbf16>, vector<32x128xbf16>, vector<64x128xf32> -> vector<64x128xf32>
    %c0_3 = arith.constant 0 : index
    %c0_4 = arith.constant 0 : index
    %3 = vector.load %arg3[%c0_3, %c0_4] : memref<1x128xf32, #tpu.memory_space<vmem>>, vector<1x128xf32>
    %4 = vector.broadcast %3 : vector<1x128xf32> to vector<64x128xf32>
    %5 = arith.addf %2, %4 : vector<64x128xf32>
    %cst_5 = arith.constant 0.000000e+00 : f32
    %6 = vector.broadcast %cst_5 : f32 to vector<64x128xf32>
    %7 = arith.subf %6, %5 : vector<64x128xf32>
    %8 = math.exp %7 : vector<64x128xf32>
    %cst_6 = arith.constant 1.000000e+00 : f32
    %9 = vector.broadcast %cst_6 : f32 to vector<64x128xf32>
    %10 = arith.addf %9, %8 : vector<64x128xf32>
    %11 = tpu.reciprocal %10 {approx = true} : vector<64x128xf32> -> vector<64x128xf32>
    %12 = arith.truncf %11 : vector<64x128xf32> to vector<64x128xbf16>
    %c0_7 = arith.constant 0 : index
    %c0_8 = arith.constant 0 : index
    %13 = vector.load %arg4[%c0_7, %c0_8] : memref<128x16xbf16, #tpu.memory_space<vmem>>, vector<128x16xbf16>
    %cst_9 = arith.constant dense<0.000000e+00> : vector<64x16xf32>
    %14 = tpu.matmul %12, %13, %cst_9 {dimension_numbers = #tpu.dot_dimension_numbers<[1], [0], [0], [1], [0, 0, 1, 1], [], []>} : vector<64x128xbf16>, vector<128x16xbf16>, vector<64x16xf32> -> vector<64x16xf32>
    %c0_10 = arith.constant 0 : index
    %c0_11 = arith.constant 0 : index
    %15 = vector.load %arg5[%c0_10, %c0_11] : memref<1x16xf32, #tpu.memory_space<vmem>>, vector<1x16xf32>
    %16 = vector.broadcast %15 : vector<1x16xf32> to vector<64x16xf32>
    %17 = arith.addf %14, %16 : vector<64x16xf32>
    %cst_12 = arith.constant 0.000000e+00 : f32
    %18 = vector.broadcast %cst_12 : f32 to vector<64x16xf32>
    %19 = arith.subf %18, %17 : vector<64x16xf32>
    %20 = math.exp %19 : vector<64x16xf32>
    %cst_13 = arith.constant 1.000000e+00 : f32
    %21 = vector.broadcast %cst_13 : f32 to vector<64x16xf32>
    %22 = arith.addf %21, %20 : vector<64x16xf32>
    %cst_14 = arith.constant 1.000000e+00 : f32
    %23 = vector.broadcast %cst_14 : f32 to vector<64x16xf32>
    %24 = arith.divf %23, %22 : vector<64x16xf32>
    %c0_15 = arith.constant 0 : index
    %c0_16 = arith.constant 0 : index
    %25 = vector.load %arg6[%c0_15, %c0_16] : memref<64x16xf32, #tpu.memory_space<vmem>>, vector<64x16xf32>
    tpu.vector_store %arg6[%c0_15, %c0_16], %24 {strides = array<i32>} : memref<64x16xf32, #tpu.memory_space<vmem>>, vector<64x16xf32>,
    return
  }
  func.func @transform_0(%arg0: i32) -> (i32, i32) {
    %c0_i32 = arith.constant 0 : i32
    %c0_i32_0 = arith.constant 0 : i32
    return %arg0, %c0_i32 : i32, i32
  }
  func.func @transform_1(%arg0: i32) -> (i32, i32) {
    %c0_i32 = arith.constant 0 : i32
    %c0_i32_0 = arith.constant 0 : i32
    %c0_i32_1 = arith.constant 0 : i32
    return %c0_i32, %c0_i32_0 : i32, i32
  }
  func.func @transform_2(%arg0: i32) -> (i32, i32) {
    %c0_i32 = arith.constant 0 : i32
    %c0_i32_0 = arith.constant 0 : i32
    %c0_i32_1 = arith.constant 0 : i32
    return %c0_i32, %c0_i32_0 : i32, i32
  }
  func.func @transform_3(%arg0: i32) -> (i32, i32) {
    %c0_i32 = arith.constant 0 : i32
    %c0_i32_0 = arith.constant 0 : i32
    %c0_i32_1 = arith.constant 0 : i32
    return %c0_i32, %c0_i32_0 : i32, i32
  }
  func.func @transform_4(%arg0: i32) -> (i32, i32) {
    %c0_i32 = arith.constant 0 : i32
    %c0_i32_0 = arith.constant 0 : i32
    %c0_i32_1 = arith.constant 0 : i32
    return %c0_i32, %c0_i32_0 : i32, i32
  }
  func.func @transform_5(%arg0: i32) -> (i32, i32) {
    %c0_i32 = arith.constant 0 : i32
    %c0_i32_0 = arith.constant 0 : i32
    return %arg0, %c0_i32 : i32, i32
  }
}

</mosaic_0001>

<llo_original>
// kernel: _perception_forward_impl.1
$region0: #{_perception_forward_impl.1}
  #allocation0 [shape = 'u32[]', space=smem, size = 0x4, offset = 0x4, fixed_abs, tag = 'smem constant byte address 0x4 - core index']
  #allocation1 [shape = 'u32[144,128]{1,0:T(1,128)}', space=vmem, size = 0x12000, scoped, tag = 'internal scratch']
  %s0 = inlined_call_operand.vmem [shape: bf16[64,32], index: 0, kind: input, shape index: {}]
  %s1 = inlined_call_operand.vmem [shape: bf16[32,128], index: 1, kind: input, shape index: {}]
  %s2 = inlined_call_operand.vmem [shape: f32[1,128], index: 2, kind: input, shape index: {}]
  %s3 = inlined_call_operand.vmem [shape: bf16[128,16], index: 3, kind: input, shape index: {}]
  %s4 = inlined_call_operand.vmem [shape: f32[1,16], index: 4, kind: input, shape index: {}]
  %s5 = inlined_call_operand.vmem [shape: f32[64,16], index: 5, kind: output, shape index: {}]
  %s6 = sld [smem:[#allocation0]]
  $region30: #{_perception_forward_impl.1} parent=0
    _
  %s8 = ssub.s32 1, %s6
  %s9 = scalar_select 0, %s8, %s6
  // Predicated region
  $region2: #{_perception_forward_impl.1} parent=0 // pred_check
    _
  $region3: #{_perception_forward_impl.1} parent=0 // pred_check_branch
    %11 = sbr.rel (0) target = $region5
  $region4: #{_perception_forward_impl.1} parent=0 // pred_region
    _
  $region5: #{_perception_forward_impl.1} parent=0 // pred_fallthru
    _
  // Predicated region
  $region6: #{_perception_forward_impl.1} parent=0 // pred_check
    _
  $region7: #{_perception_forward_impl.1} parent=0 // pred_check_branch
    %13 = sbr.rel (0) target = $region9
  $region8: #{_perception_forward_impl.1} parent=0 // pred_region
    _
  $region9: #{_perception_forward_impl.1} parent=0 // pred_fallthru
    _
  // Predicated region
  $region10: #{_perception_forward_impl.1} parent=0 // pred_check
    _
  $region11: #{_perception_forward_impl.1} parent=0 // pred_check_branch
    %15 = sbr.rel (0) target = $region13
  $region12: #{_perception_forward_impl.1} parent=0 // pred_region
    _
  $region13: #{_perception_forward_impl.1} parent=0 // pred_fallthru
    _
  // Predicated region
  $region14: #{_perception_forward_impl.1} parent=0 // pred_check
    _
  $region15: #{_perception_forward_impl.1} parent=0 // pred_check_branch
    %17 = sbr.rel (0) target = $region17
  $region16: #{_perception_forward_impl.1} parent=0 // pred_region
    _
  $region17: #{_perception_forward_impl.1} parent=0 // pred_fallthru
    _
  // Predicated region
  $region18: #{_perception_forward_impl.1} parent=0 // pred_check
    _
  $region19: #{_perception_forward_impl.1} parent=0 // pred_check_branch
    %19 = sbr.rel (0) target = $region21
  $region20: #{_perception_forward_impl.1} parent=0 // pred_region
    _
  $region21: #{_perception_forward_impl.1} parent=0 // pred_fallthru
    _
  %v21 = vld [vmem:[%s0] sm:$0xf]
  %v22 = vld [vmem:[%s0 + $0x4] sm:$0xf]
  %v23 = vld [vmem:[%s0 + $0x8] sm:$0xf]
  %v24 = vld [vmem:[%s0 + $0xc] sm:$0xf]
  %v25 = vld [vmem:[%s0 + $0x10] sm:$0xf]
  %v26 = vld [vmem:[%s0 + $0x14] sm:$0xf]
  %v27 = vld [vmem:[%s0 + $0x18] sm:$0xf]
  %v28 = vld [vmem:[%s0 + $0x1c] sm:$0xf]
  %v29 = vld [vmem:[%s1] sm:$0xf]
  %v30 = vld [vmem:[%s1 + $0x4] sm:$0xf]
  %v31 = vld [vmem:[%s1 + $0x8] sm:$0xf]
  %v32 = vld [vmem:[%s1 + $0xc] sm:$0xf]
  %v33 = vld [vmem:[%s2] sm:$0x1]
  %v35 = vlaneseq
  %v36 = vshrl.u32 %v35, 7
  %v37 = vsub.s32 0, %v36
  %v38 = vrot.slane %v33, %v37
  %v48 = vunpack.c.l.b16 %v21
  %v49 = vunpack.c.l.b16 %v22
  %v50 = vunpack.c.l.b16 %v23
  %v51 = vunpack.c.l.b16 %v24
  %v52 = vunpack.c.l.b16 %v25
  %v53 = vunpack.c.l.b16 %v26
  %v54 = vunpack.c.l.b16 %v27
  %v55 = vunpack.c.l.b16 %v28
  %v56 = vpack.c.b16 %v49, %v48
  %v57 = vpack.c.b16 %v51, %v50
  %v58 = vpack.c.b16 %v53, %v52
  %v59 = vpack.c.b16 %v55, %v54
  %v64 = vunpack.c.l.b16 %v29
  %v65 = vunpack.c.l.b16 %v30
  %v66 = vunpack.c.l.b16 %v31
  %v67 = vunpack.c.l.b16 %v32
  %v68 = vpack.c.b16 %v65, %v64
  %v69 = vpack.c.b16 %v67, %v66
  %vm72 = vcmask 261120
  %v74 = vsel %vm72, %v56, 0
  %v77 = vsel %vm72, %v57, 0
  %v80 = vsel %vm72, %v58, 0
  %v83 = vsel %vm72, %v59, 0
  %85 = vmatprep.subr.bf16.mxu0 0
  %86 = vmatpush1.bf16.msra.mxu0 0
  %87 = vmatprep.subr.bf16.mxu0 0
  %88 = vmatpush1.bf16.msra.mxu0 0
  %89 = vmatprep.subr.bf16.mxu0 0
  %90 = vmatpush1.bf16.msra.mxu0 0
  %91 = vmatprep.subr.bf16.mxu0 0
  %92 = vmatpush1.bf16.msra.mxu0 0
  %93 = vmatprep.subr.bf16.mxu0 0
  %94 = vmatpush1.bf16.msra.mxu0 0
  %95 = vmatprep.subr.bf16.mxu0 0
  %96 = vmatpush1.bf16.msra.mxu0 0
  %97 = vmatprep.subr.bf16.mxu0 0
  %98 = vmatpush1.bf16.msra.mxu0 %v69
  %99 = vmatprep.subr.bf16.mxu0 0
  %100 = vmatpush1.bf16.msra.mxu0 %v68
  %101 = vmatprep.subr.bf16.mxu0 0
  %102 = vmatpush2.bf16.msra.mxu0 0
  %103 = vmatprep.subr.bf16.mxu0 0
  %104 = vmatpush2.bf16.msra.mxu0 0
  %105 = vmatprep.subr.bf16.mxu0 0
  %106 = vmatpush2.bf16.msra.mxu0 0
  %107 = vmatprep.subr.bf16.mxu0 0
  %108 = vmatpush2.bf16.msra.mxu0 0
  %109 = vmatprep.subr.bf16.mxu0 0
  %110 = vmatpush2.bf16.msra.mxu0 0
  %111 = vmatprep.subr.bf16.mxu0 0
  %112 = vmatpush2.bf16.msra.mxu0 0
  %113 = vmatprep.subr.bf16.mxu0 0
  %114 = vmatpush2.bf16.msra.mxu0 0
  %115 = vmatprep.subr.bf16.mxu0 0
  %116 = vmatpush2.bf16.msra.mxu0 0
  %117 = vmatprep.mubr.bf16.mxu0 0
  %118 = vmatmul.mubr.bf16.gmra.mxu0 %v74
  %v119 = vpop.f32.mrf.mxu0
  %v120 = vadd.f32 %v38, %v119
  %v121 = vpop.f32.mrf.mxu0
  %v122 = vpop.f32.mrf.mxu0
  %v123 = vadd.f32 %v38, %v122
  %v124 = vpop.f32.mrf.mxu0
  %125 = vmatprep.mubr.bf16.mxu0 0
  %126 = vmatmul.mubr.bf16.gmra.mxu0 %v77
  %v127 = vpop.f32.mrf.mxu0
  %v128 = vadd.f32 %v38, %v127
  %v129 = vpop.f32.mrf.mxu0
  %v130 = vpop.f32.mrf.mxu0
  %v131 = vadd.f32 %v38, %v130
  %v132 = vpop.f32.mrf.mxu0
  %133 = vmatprep.mubr.bf16.mxu0 0
  %134 = vmatmul.mubr.bf16.gmra.mxu0 %v80
  %v135 = vpop.f32.mrf.mxu0
  %v136 = vadd.f32 %v38, %v135
  %v137 = vpop.f32.mrf.mxu0
  %v138 = vpop.f32.mrf.mxu0
  %v139 = vadd.f32 %v38, %v138
  %v140 = vpop.f32.mrf.mxu0
  %141 = vmatprep.mubr.bf16.mxu0 0
  %142 = vmatmul.mubr.bf16.gmra.mxu0 %v83
  %v143 = vpop.f32.mrf.mxu0
  %v144 = vadd.f32 %v38, %v143
  %v145 = vpop.f32.mrf.mxu0
  %v146 = vpop.f32.mrf.mxu0
  %v147 = vadd.f32 %v38, %v146
  %v148 = vpop.f32.mrf.mxu0
  %149 = vdwg.mxu0
  %v150 = vsub.f32 0.0, %v120
  %v151 = vsub.f32 0.0, %v123
  %v152 = vsub.f32 0.0, %v128
  %v153 = vsub.f32 0.0, %v131
  %v154 = vsub.f32 0.0, %v136
  %v155 = vsub.f32 0.0, %v139
  %v156 = vsub.f32 0.0, %v144
  %v157 = vsub.f32 0.0, %v147
  %v158 = vmul.f32 %v150, 1.442695
  %v159 = vpow.pop %v158
  %v160 = vmul.f32 %v151, 1.442695
  %v161 = vpow.pop %v160
  %v162 = vmul.f32 %v152, 1.442695
  %v163 = vpow.pop %v162
  %v164 = vmul.f32 %v153, 1.442695
  %v165 = vpow.pop %v164
  %v166 = vmul.f32 %v154, 1.442695
  %v167 = vpow.pop %v166
  %v168 = vmul.f32 %v155, 1.442695
  %v169 = vpow.pop %v168
  %v170 = vmul.f32 %v156, 1.442695
  %v171 = vpow.pop %v170
  %v172 = vmul.f32 %v157, 1.442695
  %v173 = vpow.pop %v172
  %v174 = vadd.f32 %v159, 1.0
  %v175 = vadd.f32 %v161, 1.0
  %v176 = vadd.f32 %v163, 1.0
  %v177 = vadd.f32 %v165, 1.0
  %v178 = vadd.f32 %v167, 1.0
  %v179 = vadd.f32 %v169, 1.0
  %v180 = vadd.f32 %v171, 1.0
  %v181 = vadd.f32 %v173, 1.0
  %v182 = vrcp.pop %v174
  %v183 = vrcp.pop %v175
  %v184 = vrcp.pop %v176
  %v185 = vrcp.pop %v177
  %v186 = vrcp.pop %v178
  %v187 = vrcp.pop %v179
  %v188 = vrcp.pop %v180
  %v189 = vrcp.pop %v181
  %v190 = vpack.c.bf16 %v183, %v182
  %v191 = vpack.c.bf16 %v185, %v184
  %v192 = vpack.c.bf16 %v187, %v186
  %v193 = vpack.c.bf16 %v189, %v188
  %v194 = vld [vmem:[%s3] sm:$0xf]
  %v195 = vld [vmem:[%s3 + $0x4] sm:$0xf]
  %v196 = vld [vmem:[%s3 + $0x8] sm:$0xf]
  %v197 = vld [vmem:[%s3 + $0xc] sm:$0xf]
  %v198 = vld [vmem:[%s3 + $0x10] sm:$0xf]
  %v199 = vld [vmem:[%s3 + $0x14] sm:$0xf]
  %v200 = vld [vmem:[%s3 + $0x18] sm:$0xf]
  %v201 = vld [vmem:[%s3 + $0x1c] sm:$0xf]
  %v202 = vld [vmem:[%s3 + $0x20] sm:$0xf]
  %v203 = vld [vmem:[%s3 + $0x24] sm:$0xf]
  %v204 = vld [vmem:[%s3 + $0x28] sm:$0xf]
  %v205 = vld [vmem:[%s3 + $0x2c] sm:$0xf]
  %v206 = vld [vmem:[%s3 + $0x30] sm:$0xf]
  %v207 = vld [vmem:[%s3 + $0x34] sm:$0xf]
  %v208 = vld [vmem:[%s3 + $0x38] sm:$0xf]
  %v209 = vld [vmem:[%s3 + $0x3c] sm:$0xf]
  %v210 = vld [vmem:[%s4] sm:$0x1]
  %v212 = vlaneseq
  %v213 = vshrl.u32 %v212, 7
  %v214 = vsub.s32 0, %v213
  %v215 = vrot.slane %v210, %v214
  %v233 = vunpack.c.l.b16 %v194
  %v234 = vunpack.c.l.b16 %v195
  %v235 = vunpack.c.l.b16 %v196
  %v236 = vunpack.c.l.b16 %v197
  %v237 = vunpack.c.l.b16 %v198
  %v238 = vunpack.c.l.b16 %v199
  %v239 = vunpack.c.l.b16 %v200
  %v240 = vunpack.c.l.b16 %v201
  %v241 = vunpack.c.l.b16 %v202
  %v242 = vunpack.c.l.b16 %v203
  %v243 = vunpack.c.l.b16 %v204
  %v244 = vunpack.c.l.b16 %v205
  %v245 = vunpack.c.l.b16 %v206
  %v246 = vunpack.c.l.b16 %v207
  %v247 = vunpack.c.l.b16 %v208
  %v248 = vunpack.c.l.b16 %v209
  %v249 = vpack.c.b16 %v234, %v233
  %v250 = vpack.c.b16 %v236, %v235
  %v251 = vpack.c.b16 %v238, %v237
  %v252 = vpack.c.b16 %v240, %v239
  %v253 = vpack.c.b16 %v242, %v241
  %v254 = vpack.c.b16 %v244, %v243
  %v255 = vpack.c.b16 %v246, %v245
  %v256 = vpack.c.b16 %v248, %v247
  %265 = vmatprep.subr.bf16.mxu0 0
  %266 = vmatpush1.bf16.msra.mxu0 %v256
  %267 = vmatprep.subr.bf16.mxu0 0
  %268 = vmatpush1.bf16.msra.mxu0 %v255
  %269 = vmatprep.subr.bf16.mxu0 0
  %270 = vmatpush1.bf16.msra.mxu0 %v254
  %271 = vmatprep.subr.bf16.mxu0 0
  %272 = vmatpush1.bf16.msra.mxu0 %v253
  %273 = vmatprep.subr.bf16.mxu0 0
  %274 = vmatpush1.bf16.msra.mxu0 %v252
  %275 = vmatprep.subr.bf16.mxu0 0
  %276 = vmatpush1.bf16.msra.mxu0 %v251
  %277 = vmatprep.subr.bf16.mxu0 0
  %278 = vmatpush1.bf16.msra.mxu0 %v250
  %279 = vmatprep.subr.bf16.mxu0 0
  %280 = vmatpush1.bf16.msra.mxu0 %v249
  %281 = vmatprep.subr.bf16.mxu0 0
  %282 = vmatpush2.bf16.msra.mxu0 0
  %283 = vmatprep.subr.bf16.mxu0 0
  %284 = vmatpush2.bf16.msra.mxu0 0
  %285 = vmatprep.subr.bf16.mxu0 0
  %286 = vmatpush2.bf16.msra.mxu0 0
  %287 = vmatprep.subr.bf16.mxu0 0
  %288 = vmatpush2.bf16.msra.mxu0 0
  %289 = vmatprep.subr.bf16.mxu0 0
  %290 = vmatpush2.bf16.msra.mxu0 0
  %291 = vmatprep.subr.bf16.mxu0 0
  %292 = vmatpush2.bf16.msra.mxu0 0
  %293 = vmatprep.subr.bf16.mxu0 0
  %294 = vmatpush2.bf16.msra.mxu0 0
  %295 = vmatprep.subr.bf16.mxu0 0
  %296 = vmatpush2.bf16.msra.mxu0 0
  %297 = vmatprep.mubr.bf16.mxu0 0
  %298 = vmatmul.mubr.bf16.gmra.mxu0 %v190
  %v299 = vpop.f32.mrf.mxu0
  %v300 = vadd.f32 %v215, %v299
  %v301 = vpop.f32.mrf.mxu0
  %v302 = vpop.f32.mrf.mxu0
  %v303 = vadd.f32 %v215, %v302
  %v304 = vpop.f32.mrf.mxu0
  %305 = vmatprep.mubr.bf16.mxu0 0
  %306 = vmatmul.mubr.bf16.gmra.mxu0 %v191
  %v307 = vpop.f32.mrf.mxu0
  %v308 = vadd.f32 %v215, %v307
  %v309 = vpop.f32.mrf.mxu0
  %v310 = vpop.f32.mrf.mxu0
  %v311 = vadd.f32 %v215, %v310
  %v312 = vpop.f32.mrf.mxu0
  %313 = vmatprep.mubr.bf16.mxu0 0
  %314 = vmatmul.mubr.bf16.gmra.mxu0 %v192
  %v315 = vpop.f32.mrf.mxu0
  %v316 = vadd.f32 %v215, %v315
  %v317 = vpop.f32.mrf.mxu0
  %v318 = vpop.f32.mrf.mxu0
  %v319 = vadd.f32 %v215, %v318
  %v320 = vpop.f32.mrf.mxu0
  %321 = vmatprep.mubr.bf16.mxu0 0
  %322 = vmatmul.mubr.bf16.gmra.mxu0 %v193
  %v323 = vpop.f32.mrf.mxu0
  %v324 = vadd.f32 %v215, %v323
  %v325 = vpop.f32.mrf.mxu0
  %v326 = vpop.f32.mrf.mxu0
  %v327 = vadd.f32 %v215, %v326
  %v328 = vpop.f32.mrf.mxu0
  %329 = vdwg.mxu0
  %v330 = vsub.f32 0.0, %v300
  %v331 = vsub.f32 0.0, %v303
  %v332 = vsub.f32 0.0, %v308
  %v333 = vsub.f32 0.0, %v311
  %v334 = vsub.f32 0.0, %v316
  %v335 = vsub.f32 0.0, %v319
  %v336 = vsub.f32 0.0, %v324
  %v337 = vsub.f32 0.0, %v327
  %v338 = vmul.f32 %v330, 1.442695
  %v339 = vpow.pop %v338
  %v340 = vmul.f32 %v331, 1.442695
  %v341 = vpow.pop %v340
  %v342 = vmul.f32 %v332, 1.442695
  %v343 = vpow.pop %v342
  %v344 = vmul.f32 %v333, 1.442695
  %v345 = vpow.pop %v344
  %v346 = vmul.f32 %v334, 1.442695
  %v347 = vpow.pop %v346
  %v348 = vmul.f32 %v335, 1.442695
  %v349 = vpow.pop %v348
  %v350 = vmul.f32 %v336, 1.442695
  %v351 = vpow.pop %v350
  %v352 = vmul.f32 %v337, 1.442695
  %v353 = vpow.pop %v352
  %v354 = vadd.f32 %v339, 1.0
  %v355 = vadd.f32 %v341, 1.0
  %v356 = vadd.f32 %v343, 1.0
  %v357 = vadd.f32 %v345, 1.0
  %v358 = vadd.f32 %v347, 1.0
  %v359 = vadd.f32 %v349, 1.0
  %v360 = vadd.f32 %v351, 1.0
  %v361 = vadd.f32 %v353, 1.0
  %v362 = vrcp.pop %v354
  %v363 = vmul.f32 1.0, %v362
  %v364 = vrcp.pop %v355
  %v365 = vmul.f32 1.0, %v364
  %v366 = vrcp.pop %v356
  %v367 = vmul.f32 1.0, %v366
  %v368 = vrcp.pop %v357
  %v369 = vmul.f32 1.0, %v368
  %v370 = vrcp.pop %v358
  %v371 = vmul.f32 1.0, %v370
  %v372 = vrcp.pop %v359
  %v373 = vmul.f32 1.0, %v372
  %v374 = vrcp.pop %v360
  %v375 = vmul.f32 1.0, %v374
  %v376 = vrcp.pop %v361
  %v377 = vmul.f32 1.0, %v376
  %vm378 = vcmask 130048
  %379 = vst.msk [vmem:[%s5] sm:$0xff] %vm378, %v363
  %380 = vst.msk [vmem:[%s5 + $0x8] sm:$0xff] %vm378, %v365
  %381 = vst.msk [vmem:[%s5 + $0x10] sm:$0xff] %vm378, %v367
  %382 = vst.msk [vmem:[%s5 + $0x18] sm:$0xff] %vm378, %v369
  %383 = vst.msk [vmem:[%s5 + $0x20] sm:$0xff] %vm378, %v371
  %384 = vst.msk [vmem:[%s5 + $0x28] sm:$0xff] %vm378, %v373
  %385 = vst.msk [vmem:[%s5 + $0x30] sm:$0xff] %vm378, %v375
  %386 = vst.msk [vmem:[%s5 + $0x38] sm:$0xff] %vm378, %v377
  // Predicated region
  $region22: #{_perception_forward_impl.1} parent=0 // pred_check
    _
  $region23: #{_perception_forward_impl.1} parent=0 // pred_check_branch
    %388 = sbr.rel (0) target = $region25
  $region24: #{_perception_forward_impl.1} parent=0 // pred_region
    _
  $region25: #{_perception_forward_impl.1} parent=0 // pred_fallthru
    _
  // Predicated region
  $region26: #{_perception_forward_impl.1} parent=0 // pred_check
    _
  $region27: #{_perception_forward_impl.1} parent=0 // pred_check_branch
    %390 = sbr.rel (0) target = $region29
  $region28: #{_perception_forward_impl.1} parent=0 // pred_region
    _
  $region29: #{_perception_forward_impl.1} parent=0 // pred_fallthru
    _

</llo_original>
